<compile_context>
chip_gen: v7x
topology: tpu7x:2x2x1
jax: 0.10.0
libtpu: 0.0.40
codegen_flags: <defaults>
</compile_context>

<pallas_src>
import functools

import jax
import jax.numpy as jnp
from jax.experimental import pallas as pl
from jax.experimental.pallas import tpu as pltpu


def resblock_kernel(x_ref, w1_ref, b1_ref, w2_ref, b2_ref, out_ref,
                    *, H, W, NB, matmul_dtype):
    # x_ref   : (NB, Cp, H*W)  NB images; channels in sublanes, flat spatial in lanes
    # w*_ref  : (Cp, 9*Cp)     conv weights, w[co, (ky*3+kx)*Cp + ci]  (zero-padded)
    # b*_ref  : (Cp, 1)        biases (zero-padded)
    # out_ref : (NB, Cp, H*W)  residual output
    Cp = x_ref.shape[1]
    HW = H * W
    L = NB * HW  # combined lane extent (multiple of 128 here)

    # Concatenate the NB images along the lane axis: static 128-multiple lane slices only,
    # so this is whole-(8,128)-tile placement, not an intra-vreg shuffle.
    x = jnp.concatenate([x_ref[n] for n in range(NB)], axis=1)  # (Cp, L) f32

    # Flat-index edge masks for the implicit ReflectionPad2d(1).
    # (Any lane position where a roll wraps — across rows, or across image boundaries in the
    #  concatenated layout — is always a first/last row/col position, hence always masked.)
    idx = jax.lax.broadcasted_iota(jnp.int32, (Cp, L), 1)
    if (W & (W - 1)) == 0 and (H & (H - 1)) == 0:
        # power-of-two fast path: single-slot shift/and instead of a VPU divide sequence
        log2w = W.bit_length() - 1
        row = (idx >> log2w) & (H - 1)
        col = idx & (W - 1)
    else:
        q = idx // W
        col = idx - q * W
        row = q % H
    first_row = row == 0
    last_row = row == H - 1
    first_col = col == 0
    last_col = col == W - 1

    def roll(v, s):
        # Circular shift along the flat spatial (lane) axis: result[p] = v[(p - s) % L].
        return pltpu.roll(v, shift=s % L, axis=1)

    def conv3x3_relu(v, w_ref, b_ref):
        # 3x3 conv over the reflection-padded image(s) as a single MXU matmul.
        r_up = roll(v, W)    # r_up[p] = v[p - W]  (row i-1 in the interior)
        r_dn = roll(v, -W)   # r_dn[p] = v[p + W]  (row i+1 in the interior)
        rows = (
            jnp.where(first_row, r_dn, r_up),  # dy = -1 (row 0 reflects to row 1)
            v,                                 # dy =  0
            jnp.where(last_row, r_up, r_dn),   # dy = +1 (row H-1 reflects to row H-2)
        )
        taps = []
        for rv in rows:
            c_l = roll(rv, 1)    # c_l[p] = rv[p - 1]
            c_r = roll(rv, -1)   # c_r[p] = rv[p + 1]
            taps.append(jnp.where(first_col, c_r, c_l))  # dx = -1 (col 0 -> col 1)
            taps.append(rv)                              # dx =  0
            taps.append(jnp.where(last_col, c_l, c_r))   # dx = +1 (col W-1 -> col W-2)
        # 9 pieces of Cp sublanes each -> 8-sublane-aligned concat (no masked sublane writes).
        patches = jnp.concatenate(taps, axis=0)          # (9*Cp, L)
        y = jnp.dot(w_ref[...].astype(matmul_dtype), patches.astype(matmul_dtype),
                    preferred_element_type=jnp.float32)
        return jnp.maximum(y + b_ref[...], 0.0)          # fused bias + ReLU (f32, VPU)

    y1 = conv3x3_relu(x, w1_ref, b1_ref)
    y2 = conv3x3_relu(y1, w2_ref, b2_ref)
    res = x + y2                                          # residual add (Cp, L)
    for n in range(NB):                                   # lane-dense unmasked stores
        out_ref[n] = res[:, n * HW:(n + 1) * HW].astype(out_ref.dtype)


def resblock_forward(x_nchw, w1_oihw, b1, w2_oihw, b2,
                     *, images_per_step=None, matmul_dtype=jnp.float32):
    """x: (N, C, H, W) f32; conv weights in PyTorch OIHW (C, C, 3, 3); biases (C,).

    images_per_step: images folded into each grid step.  Default = N (whole batch in one
    step: best on single-TensorCore v5e/v6e and for overhead-bound sizes).  On v7x set
    N // 2 so both TensorCores get a parallel step.
    matmul_dtype: keep f32 for validation; use jnp.bfloat16 on v6e/v7x production sizes.
    """
    N, C, H, W = x_nchw.shape
    HW = H * W
    Cp = ((C + 7) // 8) * 8                         # sublane-aligned channel count

    NB = N if images_per_step is None else images_per_step
    assert N % NB == 0, "images_per_step must divide the batch"
    n_steps = N // NB

    # Zero-pad channels once (tiny one-time HBM cost); free (N,Cp,H,W)->(N,Cp,HW) reshape.
    x_p = jnp.pad(x_nchw.astype(jnp.float32),
                  ((0, 0), (0, Cp - C), (0, 0), (0, 0))).reshape(N, Cp, HW)

    # (co, ci, ky, kx) -> (co, (ky*3+kx)*Cp + ci), zero-padded: tiny one-time param repack.
    def pack_w(w):
        w = jnp.transpose(w, (0, 2, 3, 1))                       # (co, ky, kx, ci)
        w = jnp.pad(w, ((0, Cp - C), (0, 0), (0, 0), (0, Cp - C)))
        return w.reshape(Cp, 9 * Cp).astype(jnp.float32)

    def pack_b(b):
        return jnp.pad(b, (0, Cp - C)).reshape(Cp, 1).astype(jnp.float32)

    w1m, w2m = pack_w(w1_oihw), pack_w(w2_oihw)
    b1r, b2r = pack_b(b1), pack_b(b2)

    kernel = functools.partial(resblock_kernel, H=H, W=W, NB=NB,
                               matmul_dtype=matmul_dtype)
    out_flat = pl.pallas_call(
        kernel,
        out_shape=jax.ShapeDtypeStruct((N, Cp, HW), jnp.float32),
        grid_spec=pltpu.PrefetchScalarGridSpec(
            num_scalar_prefetch=0,
            grid=(n_steps,),
            in_specs=[
                pl.BlockSpec((NB, Cp, HW), lambda n: (n, 0, 0)),
                # Weights/biases are grid-invariant (same block every step).
                pl.BlockSpec((Cp, 9 * Cp), lambda n: (0, 0)),
                pl.BlockSpec((Cp, 1), lambda n: (0, 0)),
                pl.BlockSpec((Cp, 9 * Cp), lambda n: (0, 0)),
                pl.BlockSpec((Cp, 1), lambda n: (0, 0)),
            ],
            out_specs=pl.BlockSpec((NB, Cp, HW), lambda n: (n, 0, 0)),
        ),
        compiler_params=pltpu.CompilerParams(
            dimension_semantics=("parallel",)),
    )(x_p, w1m, b1r, w2m, b2r)

    # Free reshape back to NCHW; drop the zero-padded channels.
    return out_flat.reshape(N, Cp, H, W)[:, :C]


def resblock_reference(x, w1, b1, w2, b2):
    """Pure-JAX reference (lax.conv, NCHW/OIHW) for correctness checking."""
    def conv_relu(y, w, b):
        yp = jnp.pad(y, ((0, 0), (0, 0), (1, 1), (1, 1)), mode="reflect")
        o = jax.lax.conv_general_dilated(
            yp, w, window_strides=(1, 1), padding="VALID",
            dimension_numbers=("NCHW", "OIHW", "NCHW"))
        return jax.nn.relu(o + b.reshape(1, -1, 1, 1))

    return x + conv_relu(conv_relu(x, w1, b1), w2, b2)


if __name__ == "__main__":
    key = jax.random.PRNGKey(0)
    k_x, k_w1, k_b1, k_w2, k_b2 = jax.random.split(key, 5)

    N, C, H, W = 2, 4, 16, 16  # in_channels=4, kernel_size=3
    x = jax.random.normal(k_x, (N, C, H, W), dtype=jnp.float32)

    # Deterministic synthetic Conv2d(C, C, 3) parameters in PyTorch OIHW layout.
    w1 = 0.1 * jax.random.normal(k_w1, (C, C, 3, 3), dtype=jnp.float32)
    b1 = 0.1 * jax.random.normal(k_b1, (C,), dtype=jnp.float32)
    w2 = 0.1 * jax.random.normal(k_w2, (C, C, 3, 3), dtype=jnp.float32)
    b2 = 0.1 * jax.random.normal(k_b2, (C,), dtype=jnp.float32)

    out = jax.block_until_ready(resblock_forward(x, w1, b1, w2, b2))
    ref = jax.block_until_ready(resblock_reference(x, w1, b1, w2, b2))

    assert out.shape == (N, C, H, W)
    assert jnp.allclose(out, ref, atol=1e-4, rtol=1e-4), "mismatch vs reference"

    print("KERNEL_OK")
</pallas_src>

<mosaic_0001>
module attributes {stable_mosaic.version = 11 : i64} {
  func.func @resblock_kernel(%arg0: i32, %arg1: memref<2x8x256xf32, #tpu.memory_space<vmem>>, %arg2: memref<8x72xf32, #tpu.memory_space<vmem>>, %arg3: memref<8x1xf32, #tpu.memory_space<vmem>>, %arg4: memref<8x72xf32, #tpu.memory_space<vmem>>, %arg5: memref<8x1xf32, #tpu.memory_space<vmem>>, %arg6: memref<2x8x256xf32, #tpu.memory_space<vmem>>) attributes {dimension_semantics = [#tpu.dimension_semantics<parallel>], iteration_bounds = array<i64: 1>, scalar_prefetch = 0 : i64, scratch_operands = 0 : i64, tpu.core_type = #tpu.core_type<tc>, window_params = [{transform_indices = @transform_0, window_bounds = array<i64: 2, 8, 256>}, {pipeline_mode = #tpu.pipeline_mode<synchronous>, transform_indices = @transform_1, window_bounds = array<i64: 8, 72>}, {pipeline_mode = #tpu.pipeline_mode<synchronous>, transform_indices = @transform_2, window_bounds = array<i64: 8, 1>}, {pipeline_mode = #tpu.pipeline_mode<synchronous>, transform_indices = @transform_3, window_bounds = array<i64: 8, 72>}, {pipeline_mode = #tpu.pipeline_mode<synchronous>, transform_indices = @transform_4, window_bounds = array<i64: 8, 1>}, {transform_indices = @transform_5, window_bounds = array<i64: 2, 8, 256>}]} {
    %c0 = arith.constant 0 : index
    %c0_0 = arith.constant 0 : index
    %c0_1 = arith.constant 0 : index
    %0 = vector.load %arg1[%c0, %c0_0, %c0_1] : memref<2x8x256xf32, #tpu.memory_space<vmem>>, vector<1x8x256xf32>
    %1 = vector.shape_cast %0 : vector<1x8x256xf32> to vector<8x256xf32>
    %c1 = arith.constant 1 : index
    %c0_2 = arith.constant 0 : index
    %c0_3 = arith.constant 0 : index
    %2 = vector.load %arg1[%c1, %c0_2, %c0_3] : memref<2x8x256xf32, #tpu.memory_space<vmem>>, vector<1x8x256xf32>
    %3 = vector.shape_cast %2 : vector<1x8x256xf32> to vector<8x256xf32>
    %4 = tpu.concatenate %1, %3 in 1 : vector<8x256xf32>, vector<8x256xf32> -> vector<8x512xf32>
    %5 = tpu.iota {dimensions = array<i32: 1>} : vector<8x512xi32>
    %c4_i32 = arith.constant 4 : i32
    %6 = vector.broadcast %c4_i32 : i32 to vector<8x512xi32>
    %7 = arith.shrsi %5, %6 : vector<8x512xi32>
    %c15_i32 = arith.constant 15 : i32
    %8 = vector.broadcast %c15_i32 : i32 to vector<8x512xi32>
    %9 = arith.andi %7, %8 : vector<8x512xi32>
    %c15_i32_4 = arith.constant 15 : i32
    %10 = vector.broadcast %c15_i32_4 : i32 to vector<8x512xi32>
    %11 = arith.andi %5, %10 : vector<8x512xi32>
    %c0_i32 = arith.constant 0 : i32
    %12 = vector.broadcast %c0_i32 : i32 to vector<8x512xi32>
    %13 = arith.cmpi eq, %9, %12 : vector<8x512xi32>
    %c15_i32_5 = arith.constant 15 : i32
    %14 = vector.broadcast %c15_i32_5 : i32 to vector<8x512xi32>
    %15 = arith.cmpi eq, %9, %14 : vector<8x512xi32>
    %c0_i32_6 = arith.constant 0 : i32
    %16 = vector.broadcast %c0_i32_6 : i32 to vector<8x512xi32>
    %17 = arith.cmpi eq, %11, %16 : vector<8x512xi32>
    %c15_i32_7 = arith.constant 15 : i32
    %18 = vector.broadcast %c15_i32_7 : i32 to vector<8x512xi32>
    %19 = arith.cmpi eq, %11, %18 : vector<8x512xi32>
    %c16_i32 = arith.constant 16 : i32
    %20 = tpu.dynamic_rotate %4 by %c16_i32 dim 1 : vector<8x512xf32>, i32 -> vector<8x512xf32>
    %c496_i32 = arith.constant 496 : i32
    %21 = tpu.dynamic_rotate %4 by %c496_i32 dim 1 : vector<8x512xf32>, i32 -> vector<8x512xf32>
    %22 = arith.select %13, %21, %20 : vector<8x512xi1>, vector<8x512xf32>
    %23 = arith.select %15, %20, %21 : vector<8x512xi1>, vector<8x512xf32>
    %c1_i32 = arith.constant 1 : i32
    %24 = tpu.dynamic_rotate %22 by %c1_i32 dim 1 : vector<8x512xf32>, i32 -> vector<8x512xf32>
    %c511_i32 = arith.constant 511 : i32
    %25 = tpu.dynamic_rotate %22 by %c511_i32 dim 1 : vector<8x512xf32>, i32 -> vector<8x512xf32>
    %26 = arith.select %17, %25, %24 : vector<8x512xi1>, vector<8x512xf32>
    %27 = arith.select %19, %24, %25 : vector<8x512xi1>, vector<8x512xf32>
    %c1_i32_8 = arith.constant 1 : i32
    %28 = tpu.dynamic_rotate %4 by %c1_i32_8 dim 1 : vector<8x512xf32>, i32 -> vector<8x512xf32>
    %c511_i32_9 = arith.constant 511 : i32
    %29 = tpu.dynamic_rotate %4 by %c511_i32_9 dim 1 : vector<8x512xf32>, i32 -> vector<8x512xf32>
    %30 = arith.select %17, %29, %28 : vector<8x512xi1>, vector<8x512xf32>
    %31 = arith.select %19, %28, %29 : vector<8x512xi1>, vector<8x512xf32>
    %c1_i32_10 = arith.constant 1 : i32
    %32 = tpu.dynamic_rotate %23 by %c1_i32_10 dim 1 : vector<8x512xf32>, i32 -> vector<8x512xf32>
    %c511_i32_11 = arith.constant 511 : i32
    %33 = tpu.dynamic_rotate %23 by %c511_i32_11 dim 1 : vector<8x512xf32>, i32 -> vector<8x512xf32>
    %34 = arith.select %17, %33, %32 : vector<8x512xi1>, vector<8x512xf32>
    %35 = arith.select %19, %32, %33 : vector<8x512xi1>, vector<8x512xf32>
    %36 = tpu.concatenate %26, %22, %27, %30, %4, %31, %34, %23, %35 in 0 : vector<8x512xf32>, vector<8x512xf32>, vector<8x512xf32>, vector<8x512xf32>, vector<8x512xf32>, vector<8x512xf32>, vector<8x512xf32>, vector<8x512xf32>, vector<8x512xf32> -> vector<72x512xf32>
    %c0_12 = arith.constant 0 : index
    %c0_13 = arith.constant 0 : index
    %37 = vector.load %arg2[%c0_12, %c0_13] : memref<8x72xf32, #tpu.memory_space<vmem>>, vector<8x72xf32>
    %cst = arith.constant dense<0.000000e+00> : vector<8x512xf32>
    %38 = tpu.matmul %37, %36, %cst {dimension_numbers = #tpu.dot_dimension_numbers<[1], [0], [0], [1], [0, 0, 1, 1], [], []>} : vector<8x72xf32>, vector<72x512xf32>, vector<8x512xf32> -> vector<8x512xf32>
    %c0_14 = arith.constant 0 : index
    %c0_15 = arith.constant 0 : index
    %39 = vector.load %arg3[%c0_14, %c0_15] : memref<8x1xf32, #tpu.memory_space<vmem>>, vector<8x1xf32>
    %40 = vector.broadcast %39 : vector<8x1xf32> to vector<8x512xf32>
    %41 = arith.addf %38, %40 : vector<8x512xf32>
    %cst_16 = arith.constant 0.000000e+00 : f32
    %42 = vector.broadcast %cst_16 : f32 to vector<8x512xf32>
    %43 = arith.maximumf %41, %42 : vector<8x512xf32>
    %c16_i32_17 = arith.constant 16 : i32
    %44 = tpu.dynamic_rotate %43 by %c16_i32_17 dim 1 : vector<8x512xf32>, i32 -> vector<8x512xf32>
    %c496_i32_18 = arith.constant 496 : i32
    %45 = tpu.dynamic_rotate %43 by %c496_i32_18 dim 1 : vector<8x512xf32>, i32 -> vector<8x512xf32>
    %46 = arith.select %13, %45, %44 : vector<8x512xi1>, vector<8x512xf32>
    %47 = arith.select %15, %44, %45 : vector<8x512xi1>, vector<8x512xf32>
    %c1_i32_19 = arith.constant 1 : i32
    %48 = tpu.dynamic_rotate %46 by %c1_i32_19 dim 1 : vector<8x512xf32>, i32 -> vector<8x512xf32>
    %c511_i32_20 = arith.constant 511 : i32
    %49 = tpu.dynamic_rotate %46 by %c511_i32_20 dim 1 : vector<8x512xf32>, i32 -> vector<8x512xf32>
    %50 = arith.select %17, %49, %48 : vector<8x512xi1>, vector<8x512xf32>
    %51 = arith.select %19, %48, %49 : vector<8x512xi1>, vector<8x512xf32>
    %c1_i32_21 = arith.constant 1 : i32
    %52 = tpu.dynamic_rotate %43 by %c1_i32_21 dim 1 : vector<8x512xf32>, i32 -> vector<8x512xf32>
    %c511_i32_22 = arith.constant 511 : i32
    %53 = tpu.dynamic_rotate %43 by %c511_i32_22 dim 1 : vector<8x512xf32>, i32 -> vector<8x512xf32>
    %54 = arith.select %17, %53, %52 : vector<8x512xi1>, vector<8x512xf32>
    %55 = arith.select %19, %52, %53 : vector<8x512xi1>, vector<8x512xf32>
    %c1_i32_23 = arith.constant 1 : i32
    %56 = tpu.dynamic_rotate %47 by %c1_i32_23 dim 1 : vector<8x512xf32>, i32 -> vector<8x512xf32>
    %c511_i32_24 = arith.constant 511 : i32
    %57 = tpu.dynamic_rotate %47 by %c511_i32_24 dim 1 : vector<8x512xf32>, i32 -> vector<8x512xf32>
    %58 = arith.select %17, %57, %56 : vector<8x512xi1>, vector<8x512xf32>
    %59 = arith.select %19, %56, %57 : vector<8x512xi1>, vector<8x512xf32>
    %60 = tpu.concatenate %50, %46, %51, %54, %43, %55, %58, %47, %59 in 0 : vector<8x512xf32>, vector<8x512xf32>, vector<8x512xf32>, vector<8x512xf32>, vector<8x512xf32>, vector<8x512xf32>, vector<8x512xf32>, vector<8x512xf32>, vector<8x512xf32> -> vector<72x512xf32>
    %c0_25 = arith.constant 0 : index
    %c0_26 = arith.constant 0 : index
    %61 = vector.load %arg4[%c0_25, %c0_26] : memref<8x72xf32, #tpu.memory_space<vmem>>, vector<8x72xf32>
    %cst_27 = arith.constant dense<0.000000e+00> : vector<8x512xf32>
    %62 = tpu.matmul %61, %60, %cst_27 {dimension_numbers = #tpu.dot_dimension_numbers<[1], [0], [0], [1], [0, 0, 1, 1], [], []>} : vector<8x72xf32>, vector<72x512xf32>, vector<8x512xf32> -> vector<8x512xf32>
    %c0_28 = arith.constant 0 : index
    %c0_29 = arith.constant 0 : index
    %63 = vector.load %arg5[%c0_28, %c0_29] : memref<8x1xf32, #tpu.memory_space<vmem>>, vector<8x1xf32>
    %64 = vector.broadcast %63 : vector<8x1xf32> to vector<8x512xf32>
    %65 = arith.addf %62, %64 : vector<8x512xf32>
    %cst_30 = arith.constant 0.000000e+00 : f32
    %66 = vector.broadcast %cst_30 : f32 to vector<8x512xf32>
    %67 = arith.maximumf %65, %66 : vector<8x512xf32>
    %68 = arith.addf %4, %67 : vector<8x512xf32>
    %69 = vector.extract_strided_slice %68 {offsets = [0, 0], sizes = [8, 256], strides = [1, 1]} : vector<8x512xf32> to vector<8x256xf32>
    %c0_31 = arith.constant 0 : index
    %c0_32 = arith.constant 0 : index
    %c0_33 = arith.constant 0 : index
    %70 = vector.load %arg6[%c0_31, %c0_32, %c0_33] : memref<2x8x256xf32, #tpu.memory_space<vmem>>, vector<1x8x256xf32>
    %71 = vector.shape_cast %70 : vector<1x8x256xf32> to vector<8x256xf32>
    %72 = vector.shape_cast %69 : vector<8x256xf32> to vector<1x8x256xf32>
    tpu.vector_store %arg6[%c0_31, %c0_32, %c0_33], %72 {strides = array<i32>} : memref<2x8x256xf32, #tpu.memory_space<vmem>>, vector<1x8x256xf32>,
    %73 = vector.extract_strided_slice %68 {offsets = [0, 256], sizes = [8, 256], strides = [1, 1]} : vector<8x512xf32> to vector<8x256xf32>
    %c1_34 = arith.constant 1 : index
    %c0_35 = arith.constant 0 : index
    %c0_36 = arith.constant 0 : index
    %74 = vector.load %arg6[%c1_34, %c0_35, %c0_36] : memref<2x8x256xf32, #tpu.memory_space<vmem>>, vector<1x8x256xf32>
    %75 = vector.shape_cast %74 : vector<1x8x256xf32> to vector<8x256xf32>
    %76 = vector.shape_cast %73 : vector<8x256xf32> to vector<1x8x256xf32>
    tpu.vector_store %arg6[%c1_34, %c0_35, %c0_36], %76 {strides = array<i32>} : memref<2x8x256xf32, #tpu.memory_space<vmem>>, vector<1x8x256xf32>,
    return
  }
  func.func @transform_0(%arg0: i32) -> (i32, i32, i32) {
    %c0_i32 = arith.constant 0 : i32
    %c0_i32_0 = arith.constant 0 : i32
    %c0_i32_1 = arith.constant 0 : i32
    return %arg0, %c0_i32, %c0_i32_0 : i32, i32, i32
  }
  func.func @transform_1(%arg0: i32) -> (i32, i32) {
    %c0_i32 = arith.constant 0 : i32
    %c0_i32_0 = arith.constant 0 : i32
    %c0_i32_1 = arith.constant 0 : i32
    return %c0_i32, %c0_i32_0 : i32, i32
  }
  func.func @transform_2(%arg0: i32) -> (i32, i32) {
    %c0_i32 = arith.constant 0 : i32
    %c0_i32_0 = arith.constant 0 : i32
    %c0_i32_1 = arith.constant 0 : i32
    return %c0_i32, %c0_i32_0 : i32, i32
  }
  func.func @transform_3(%arg0: i32) -> (i32, i32) {
    %c0_i32 = arith.constant 0 : i32
    %c0_i32_0 = arith.constant 0 : i32
    %c0_i32_1 = arith.constant 0 : i32
    return %c0_i32, %c0_i32_0 : i32, i32
  }
  func.func @transform_4(%arg0: i32) -> (i32, i32) {
    %c0_i32 = arith.constant 0 : i32
    %c0_i32_0 = arith.constant 0 : i32
    %c0_i32_1 = arith.constant 0 : i32
    return %c0_i32, %c0_i32_0 : i32, i32
  }
  func.func @transform_5(%arg0: i32) -> (i32, i32, i32) {
    %c0_i32 = arith.constant 0 : i32
    %c0_i32_0 = arith.constant 0 : i32
    %c0_i32_1 = arith.constant 0 : i32
    return %arg0, %c0_i32, %c0_i32_0 : i32, i32, i32
  }
}

</mosaic_0001>

<llo_original>
// kernel: tpu_custom_call.1
$region0: #{tpu_custom_call.1}
  #allocation0 [shape = 'u32[]', space=smem, size = 0x4, offset = 0x4, fixed_abs, tag = 'smem constant byte address 0x4 - core index']
  #allocation1 [shape = 'u32[144,128]{1,0:T(1,128)}', space=vmem, size = 0x12000, scoped, tag = 'internal scratch']
  %s0 = inlined_call_operand.hbm [shape: f32[2,8,256], index: 0, kind: input, shape index: {}]
  %s1 = inlined_call_operand.vmem [shape: f32[8,72], index: 1, kind: input, shape index: {}]
  %s2 = inlined_call_operand.vmem [shape: f32[8,1], index: 2, kind: input, shape index: {}]
  %s3 = inlined_call_operand.vmem [shape: f32[8,72], index: 3, kind: input, shape index: {}]
  %s4 = inlined_call_operand.vmem [shape: f32[8,1], index: 4, kind: input, shape index: {}]
  %s5 = inlined_call_operand.hbm [shape: f32[2,8,256], index: 5, kind: output, shape index: {}]
  %s6 = sld [smem:[#allocation0]]
  $region34: #{tpu_custom_call.1} parent=0
    _
  %s8 = ssub.s32 1, %s6
  %s9 = scalar_select 0, %s8, %s6
  $region1: #{tpu_custom_call.1} parent=0
    #allocation2 [shape = 'u8[16384]{0}', space=vmem, size = 0x4000, scoped, tag = 'input window, operand 0, single buffered']
    #allocation3 [shape = 's32[1]{0}', space=sflag, size = 0x4, scoped, tag = 'scoped memory for tpu_custom_call.1']
    #allocation4 [shape = 's32[1]{0}', space=sflag, size = 0x4, scoped, tag = 'scoped memory for tpu_custom_call.1']
    #allocation5 [shape = 'u8[16384]{0}', space=vmem, size = 0x4000, scoped, tag = 'output window, operand 0, single buffered']
    %10 = vsyncpa [#allocation3], 0
    %11 = vsyncpa [#allocation4], 0
    // Predicated region
    $region2: #{tpu_custom_call.1} parent=1 // pred_check
      _
    $region3: #{tpu_custom_call.1} parent=1 // pred_check_branch
      %13 = sbr.rel (0) target = $region5
    $region4: #{tpu_custom_call.1} parent=1 // pred_region
      %s15 = ssub.s32 512, 512
      %16 = vsyncadd [#allocation3], %s15
      %s17 = sshll.u32 [#allocation2], 4
      %s18 = int_to_ptr.vmem [resolvable:$true] %s17
      %23 = dma.hbm_to_vmem [thread:$0]  %s0, 512, %s18, [#allocation3], 256, 256, 16
    $region5: #{tpu_custom_call.1} parent=1 // pred_fallthru
      _
    // Predicated region
    $region6: #{tpu_custom_call.1} parent=1 // pred_check
      _
    $region7: #{tpu_custom_call.1} parent=1 // pred_check_branch
      %25 = sbr.rel (0) target = $region9
    $region8: #{tpu_custom_call.1} parent=1 // pred_region
      _
    $region9: #{tpu_custom_call.1} parent=1 // pred_fallthru
      _
    // Predicated region
    $region10: #{tpu_custom_call.1} parent=1 // pred_check
      _
    $region11: #{tpu_custom_call.1} parent=1 // pred_check_branch
      %27 = sbr.rel (0) target = $region13
    $region12: #{tpu_custom_call.1} parent=1 // pred_region
      _
    $region13: #{tpu_custom_call.1} parent=1 // pred_fallthru
      _
    // Predicated region
    $region14: #{tpu_custom_call.1} parent=1 // pred_check
      _
    $region15: #{tpu_custom_call.1} parent=1 // pred_check_branch
      %29 = sbr.rel (0) target = $region17
    $region16: #{tpu_custom_call.1} parent=1 // pred_region
      _
    $region17: #{tpu_custom_call.1} parent=1 // pred_fallthru
      _
    // Predicated region
    $region18: #{tpu_custom_call.1} parent=1 // pred_check
      _
    $region19: #{tpu_custom_call.1} parent=1 // pred_check_branch
      %31 = sbr.rel (0) target = $region21
    $region20: #{tpu_custom_call.1} parent=1 // pred_region
      _
    $region21: #{tpu_custom_call.1} parent=1 // pred_fallthru
      _
    // Predicated region
    $region22: #{tpu_custom_call.1} parent=1 // pred_check
      _
    $region23: #{tpu_custom_call.1} parent=1 // pred_check_branch
      %33 = sbr.rel (0) target = $region25
    $region24: #{tpu_custom_call.1} parent=1 // pred_region
      %34 = dma.done [#allocation3], 512
    $region25: #{tpu_custom_call.1} parent=1 // pred_fallthru
      _
    %v35 = vld [vmem:[#allocation2] sm:$0xff]
    %v36 = vld [vmem:[#allocation2 + $0x8] sm:$0xff]
    %s37 = scalar_lea.vmem [#allocation2], 16
    %v38 = vld [vmem:[%s37] sm:$0xff]
    %v39 = vld [vmem:[%s37 + $0x8] sm:$0xff]
    %v40 = vlaneseq
    %v41 = vand.u32 %v40, 127
    %v42 = vadd.s32 %v41, 128
    %v43 = vadd.s32 %v41, 256
    %v44 = vadd.s32 %v41, 384
    %v45 = vshra.s32 %v41, 4
    %v46 = vshra.s32 %v42, 4
    %v47 = vshra.s32 %v43, 4
    %v48 = vshra.s32 %v44, 4
    %v49 = vand.u32 %v45, 15
    %v50 = vand.u32 %v46, 15
    %v51 = vand.u32 %v47, 15
    %v52 = vand.u32 %v48, 15
    %v53 = vand.u32 %v41, 15
    %v54 = vand.u32 %v42, 15
    %v55 = vand.u32 %v43, 15
    %v56 = vand.u32 %v44, 15
    %vm57 = vcmp.eq.s32.totalorder %v49, 0
    %vm58 = vcmp.eq.s32.totalorder %v50, 0
    %vm59 = vcmp.eq.s32.totalorder %v51, 0
    %vm60 = vcmp.eq.s32.totalorder %v52, 0
    %vm61 = vcmp.eq.s32.totalorder %v49, 15
    %vm62 = vcmp.eq.s32.totalorder %v50, 15
    %vm63 = vcmp.eq.s32.totalorder %v51, 15
    %vm64 = vcmp.eq.s32.totalorder %v52, 15
    %vm65 = vcmp.eq.s32.totalorder %v53, 0
    %vm66 = vcmp.eq.s32.totalorder %v54, 0
    %vm67 = vcmp.eq.s32.totalorder %v55, 0
    %vm68 = vcmp.eq.s32.totalorder %v56, 0
    %vm69 = vcmp.eq.s32.totalorder %v53, 15
    %vm70 = vcmp.eq.s32.totalorder %v54, 15
    %vm71 = vcmp.eq.s32.totalorder %v55, 15
    %vm72 = vcmp.eq.s32.totalorder %v56, 15
    %73 = vrot.lane.b32.xlu0 %v35, 16
    %v74 = vpop.permute.xlu0 %73
    %75 = vrot.lane.b32.xlu0 %v36, 16
    %v76 = vpop.permute.xlu0 %75
    %77 = vrot.lane.b32.xlu0 %v38, 16
    %v78 = vpop.permute.xlu0 %77
    %79 = vrot.lane.b32.xlu0 %v39, 16
    %v80 = vpop.permute.xlu0 %79
    %vm81 = vcmp.lt.s32.totalorder %v41, 16
    %v82 = vsel %vm81, %v78, %v80
    %v83 = vsel %vm81, %v76, %v78
    %v84 = vsel %vm81, %v74, %v76
    %v85 = vsel %vm81, %v80, %v74
    %86 = vrot.lane.b32.xlu0 %v35, 112
    %v87 = vpop.permute.xlu0 %86
    %88 = vrot.lane.b32.xlu0 %v36, 112
    %v89 = vpop.permute.xlu0 %88
    %90 = vrot.lane.b32.xlu0 %v38, 112
    %v91 = vpop.permute.xlu0 %90
    %92 = vrot.lane.b32.xlu0 %v39, 112
    %v93 = vpop.permute.xlu0 %92
    %vm94 = vcmp.lt.s32.totalorder %v41, 112
    %v95 = vsel %vm94, %v91, %v93
    %v96 = vsel %vm94, %v89, %v91
    %v97 = vsel %vm94, %v87, %v89
    %v98 = vsel %vm94, %v93, %v87
    %v99 = vsel %vm57, %v97, %v85
    %v100 = vsel %vm58, %v96, %v84
    %v101 = vsel %vm59, %v95, %v83
    %v102 = vsel %vm60, %v98, %v82
    %v103 = vsel %vm61, %v85, %v97
    %v104 = vsel %vm62, %v84, %v96
    %v105 = vsel %vm63, %v83, %v95
    %v106 = vsel %vm64, %v82, %v98
    %107 = vrot.lane.b32.xlu0 %v99, 1
    %v108 = vpop.permute.xlu0 %107
    %109 = vrot.lane.b32.xlu0 %v100, 1
    %v110 = vpop.permute.xlu0 %109
    %111 = vrot.lane.b32.xlu0 %v101, 1
    %v112 = vpop.permute.xlu0 %111
    %113 = vrot.lane.b32.xlu0 %v102, 1
    %v114 = vpop.permute.xlu0 %113
    %vm115 = vcmp.lt.s32.totalorder %v41, 1
    %v116 = vsel %vm115, %v112, %v114
    %v117 = vsel %vm115, %v110, %v112
    %v118 = vsel %vm115, %v108, %v110
    %v119 = vsel %vm115, %v114, %v108
    %120 = vrot.lane.b32.xlu0 %v99, 127
    %v121 = vpop.permute.xlu0 %120
    %122 = vrot.lane.b32.xlu0 %v100, 127
    %v123 = vpop.permute.xlu0 %122
    %124 = vrot.lane.b32.xlu0 %v101, 127
    %v125 = vpop.permute.xlu0 %124
    %126 = vrot.lane.b32.xlu0 %v102, 127
    %v127 = vpop.permute.xlu0 %126
    %vm128 = vcmp.lt.s32.totalorder %v41, 127
    %v129 = vsel %vm128, %v125, %v127
    %v130 = vsel %vm128, %v123, %v125
    %v131 = vsel %vm128, %v121, %v123
    %v132 = vsel %vm128, %v127, %v121
    %v133 = vsel %vm65, %v131, %v119
    %v134 = vsel %vm66, %v130, %v118
    %v135 = vsel %vm67, %v129, %v117
    %v136 = vsel %vm68, %v132, %v116
    %v137 = vsel %vm69, %v119, %v131
    %v138 = vsel %vm70, %v118, %v130
    %v139 = vsel %vm71, %v117, %v129
    %v140 = vsel %vm72, %v116, %v132
    %141 = vrot.lane.b32.xlu0 %v35, 1
    %v142 = vpop.permute.xlu0 %141
    %143 = vrot.lane.b32.xlu0 %v36, 1
    %v144 = vpop.permute.xlu0 %143
    %145 = vrot.lane.b32.xlu0 %v38, 1
    %v146 = vpop.permute.xlu0 %145
    %147 = vrot.lane.b32.xlu0 %v39, 1
    %v148 = vpop.permute.xlu0 %147
    %v149 = vsel %vm115, %v146, %v148
    %v150 = vsel %vm115, %v144, %v146
    %v151 = vsel %vm115, %v142, %v144
    %v152 = vsel %vm115, %v148, %v142
    %153 = vrot.lane.b32.xlu0 %v35, 127
    %v154 = vpop.permute.xlu0 %153
    %155 = vrot.lane.b32.xlu0 %v36, 127
    %v156 = vpop.permute.xlu0 %155
    %157 = vrot.lane.b32.xlu0 %v38, 127
    %v158 = vpop.permute.xlu0 %157
    %159 = vrot.lane.b32.xlu0 %v39, 127
    %v160 = vpop.permute.xlu0 %159
    %v161 = vsel %vm128, %v158, %v160
    %v162 = vsel %vm128, %v156, %v158
    %v163 = vsel %vm128, %v154, %v156
    %v164 = vsel %vm128, %v160, %v154
    %v165 = vsel %vm65, %v163, %v152
    %v166 = vsel %vm66, %v162, %v151
    %v167 = vsel %vm67, %v161, %v150
    %v168 = vsel %vm68, %v164, %v149
    %v169 = vsel %vm69, %v152, %v163
    %v170 = vsel %vm70, %v151, %v162
    %v171 = vsel %vm71, %v150, %v161
    %v172 = vsel %vm72, %v149, %v164
    %173 = vrot.lane.b32.xlu0 %v103, 1
    %v174 = vpop.permute.xlu0 %173
    %175 = vrot.lane.b32.xlu0 %v104, 1
    %v176 = vpop.permute.xlu0 %175
    %177 = vrot.lane.b32.xlu0 %v105, 1
    %v178 = vpop.permute.xlu0 %177
    %179 = vrot.lane.b32.xlu0 %v106, 1
    %v180 = vpop.permute.xlu0 %179
    %v181 = vsel %vm115, %v178, %v180
    %v182 = vsel %vm115, %v176, %v178
    %v183 = vsel %vm115, %v174, %v176
    %v184 = vsel %vm115, %v180, %v174
    %185 = vrot.lane.b32.xlu0 %v103, 127
    %v186 = vpop.permute.xlu0 %185
    %187 = vrot.lane.b32.xlu0 %v104, 127
    %v188 = vpop.permute.xlu0 %187
    %189 = vrot.lane.b32.xlu0 %v105, 127
    %v190 = vpop.permute.xlu0 %189
    %191 = vrot.lane.b32.xlu0 %v106, 127
    %v192 = vpop.permute.xlu0 %191
    %v193 = vsel %vm128, %v190, %v192
    %v194 = vsel %vm128, %v188, %v190
    %v195 = vsel %vm128, %v186, %v188
    %v196 = vsel %vm128, %v192, %v186
    %v197 = vsel %vm65, %v195, %v184
    %v198 = vsel %vm66, %v194, %v183
    %v199 = vsel %vm67, %v193, %v182
    %v200 = vsel %vm68, %v196, %v181
    %v201 = vsel %vm69, %v184, %v195
    %v202 = vsel %vm70, %v183, %v194
    %v203 = vsel %vm71, %v182, %v193
    %v204 = vsel %vm72, %v181, %v196
    %v205 = vld [vmem:[%s1] sm:$0xff]
    %v206 = vld [vmem:[%s2] sm:$0xff]
    %208 = vset.pattern.permute.xlu0 0
    %209 = vperm.xlu0 %208, %v206
    %v210 = vpop.permute.xlu0 %209
    %vm212 = vcmask 588800
    %v214 = vsel %vm212, %v205, 0
    %216 = vmatprep.subr.mxu0 %v134
    %217 = vmatpush1.msra.mxu0 %v133
    %218 = vmatprep.subr.mxu0 %v100
    %219 = vmatpush1.msra.mxu0 %v99
    %220 = vmatprep.subr.mxu0 %v138
    %221 = vmatpush1.msra.mxu0 %v137
    %222 = vmatprep.subr.mxu0 %v166
    %223 = vmatpush1.msra.mxu0 %v165
    %224 = vmatprep.subr.mxu0 %v36
    %225 = vmatpush1.msra.mxu0 %v35
    %226 = vmatprep.subr.mxu0 %v170
    %227 = vmatpush1.msra.mxu0 %v169
    %228 = vmatprep.subr.mxu0 %v198
    %229 = vmatpush1.msra.mxu0 %v197
    %230 = vmatprep.subr.mxu0 %v104
    %231 = vmatpush1.msra.mxu0 %v103
    %232 = vmatprep.subr.mxu0 %v202
    %233 = vmatpush1.msra.mxu0 %v201
    %234 = vmatprep.subr.mxu0 0.0
    %235 = vmatpush1.msra.mxu0 0.0
    %236 = vmatprep.subr.mxu0 0.0
    %237 = vmatpush1.msra.mxu0 0.0
    %238 = vmatprep.subr.mxu0 0.0
    %239 = vmatpush1.msra.mxu0 0.0
    %240 = vmatprep.subr.mxu0 0.0
    %241 = vmatpush1.msra.mxu0 0.0
    %242 = vmatprep.subr.mxu0 0.0
    %243 = vmatpush1.msra.mxu0 0.0
    %244 = vmatprep.subr.mxu0 0.0
    %245 = vmatpush1.msra.mxu0 0.0
    %246 = vmatprep.subr.mxu0 0.0
    %247 = vmatpush1.msra.mxu0 0.0
    %248 = vmatprep.subr.mxu0 0.0
    %249 = vmatpush1.msra.mxu0 0.0
    %250 = vmatprep.subr.mxu0 0.0
    %251 = vmatpush1.msra.mxu0 0.0
    %252 = vmatprep.subr.mxu0 0.0
    %253 = vmatpush1.msra.mxu0 0.0
    %254 = vmatprep.subr.mxu0 0.0
    %255 = vmatpush1.msra.mxu0 0.0
    %256 = vmatprep.subr.mxu0 0.0
    %257 = vmatpush1.msra.mxu0 0.0
    %258 = vmatprep.subr.mxu0 0.0
    %259 = vmatpush1.msra.mxu0 0.0
    %260 = vmatprep.subr.mxu0 0.0
    %261 = vmatpush1.msra.mxu0 0.0
    %262 = vmatprep.subr.mxu0 0.0
    %263 = vmatpush1.msra.mxu0 0.0
    %264 = vmatprep.subr.mxu0 0.0
    %265 = vmatpush1.msra.mxu0 0.0
    %266 = vmatprep.subr.mxu0 0.0
    %267 = vmatpush1.msra.mxu0 0.0
    %268 = vmatprep.subr.mxu0 0.0
    %269 = vmatpush1.msra.mxu0 0.0
    %270 = vmatprep.subr.mxu0 0.0
    %271 = vmatpush1.msra.mxu0 0.0
    %272 = vmatprep.subr.mxu0 0.0
    %273 = vmatpush1.msra.mxu0 0.0
    %274 = vmatprep.subr.mxu0 0.0
    %275 = vmatpush1.msra.mxu0 0.0
    %276 = vmatprep.subr.mxu0 0.0
    %277 = vmatpush1.msra.mxu0 0.0
    %278 = vmatprep.subr.mxu0 0.0
    %279 = vmatpush1.msra.mxu0 0.0
    %280 = vmatprep.mubr.f32.mxu0 0.0
    %281 = vmatmul.mubr.f32.gmra.mrb[0].mxu0 %v214
    %v282 = vpop.f32.mrb[0].mxu0
    %v283 = vadd.f32 %v210, %v282
    %v284 = vpop.f32.mrb[0].mxu0
    %v285 = vadd.f32 %v210, %v284
    %286 = vdwg.mxu0
    %287 = vmatprep.subr.mxu0 %v136
    %288 = vmatpush1.msra.mxu0 %v135
    %289 = vmatprep.subr.mxu0 %v102
    %290 = vmatpush1.msra.mxu0 %v101
    %291 = vmatprep.subr.mxu0 %v140
    %292 = vmatpush1.msra.mxu0 %v139
    %293 = vmatprep.subr.mxu0 %v168
    %294 = vmatpush1.msra.mxu0 %v167
    %295 = vmatprep.subr.mxu0 %v39
    %296 = vmatpush1.msra.mxu0 %v38
    %297 = vmatprep.subr.mxu0 %v172
    %298 = vmatpush1.msra.mxu0 %v171
    %299 = vmatprep.subr.mxu0 %v200
    %300 = vmatpush1.msra.mxu0 %v199
    %301 = vmatprep.subr.mxu0 %v106
    %302 = vmatpush1.msra.mxu0 %v105
    %303 = vmatprep.subr.mxu0 %v204
    %304 = vmatpush1.msra.mxu0 %v203
    %305 = vmatprep.subr.mxu0 0.0
    %306 = vmatpush1.msra.mxu0 0.0
    %307 = vmatprep.subr.mxu0 0.0
    %308 = vmatpush1.msra.mxu0 0.0
    %309 = vmatprep.subr.mxu0 0.0
    %310 = vmatpush1.msra.mxu0 0.0
    %311 = vmatprep.subr.mxu0 0.0
    %312 = vmatpush1.msra.mxu0 0.0
    %313 = vmatprep.subr.mxu0 0.0
    %314 = vmatpush1.msra.mxu0 0.0
    %315 = vmatprep.subr.mxu0 0.0
    %316 = vmatpush1.msra.mxu0 0.0
    %317 = vmatprep.subr.mxu0 0.0
    %318 = vmatpush1.msra.mxu0 0.0
    %319 = vmatprep.subr.mxu0 0.0
    %320 = vmatpush1.msra.mxu0 0.0
    %321 = vmatprep.subr.mxu0 0.0
    %322 = vmatpush1.msra.mxu0 0.0
    %323 = vmatprep.subr.mxu0 0.0
    %324 = vmatpush1.msra.mxu0 0.0
    %325 = vmatprep.subr.mxu0 0.0
    %326 = vmatpush1.msra.mxu0 0.0
    %327 = vmatprep.subr.mxu0 0.0
    %328 = vmatpush1.msra.mxu0 0.0
    %329 = vmatprep.subr.mxu0 0.0
    %330 = vmatpush1.msra.mxu0 0.0
    %331 = vmatprep.subr.mxu0 0.0
    %332 = vmatpush1.msra.mxu0 0.0
    %333 = vmatprep.subr.mxu0 0.0
    %334 = vmatpush1.msra.mxu0 0.0
    %335 = vmatprep.subr.mxu0 0.0
    %336 = vmatpush1.msra.mxu0 0.0
    %337 = vmatprep.subr.mxu0 0.0
    %338 = vmatpush1.msra.mxu0 0.0
    %339 = vmatprep.subr.mxu0 0.0
    %340 = vmatpush1.msra.mxu0 0.0
    %341 = vmatprep.subr.mxu0 0.0
    %342 = vmatpush1.msra.mxu0 0.0
    %343 = vmatprep.subr.mxu0 0.0
    %344 = vmatpush1.msra.mxu0 0.0
    %345 = vmatprep.subr.mxu0 0.0
    %346 = vmatpush1.msra.mxu0 0.0
    %347 = vmatprep.subr.mxu0 0.0
    %348 = vmatpush1.msra.mxu0 0.0
    %349 = vmatprep.subr.mxu0 0.0
    %350 = vmatpush1.msra.mxu0 0.0
    %351 = vmatprep.mubr.f32.mxu0 0.0
    %352 = vmatmul.mubr.f32.gmra.mrb[0].mxu0 %v214
    %v353 = vpop.f32.mrb[0].mxu0
    %v354 = vadd.f32 %v210, %v353
    %v355 = vpop.f32.mrb[0].mxu0
    %v356 = vadd.f32 %v210, %v355
    %357 = vdwg.mxu0
    %v358 = vmax.f32 %v283, 0.0
    %v359 = vmax.f32 %v285, 0.0
    %v360 = vmax.f32 %v354, 0.0
    %v361 = vmax.f32 %v356, 0.0
    %362 = vrot.lane.b32.xlu0 %v358, 16
    %v363 = vpop.permute.xlu0 %362
    %364 = vrot.lane.b32.xlu0 %v359, 16
    %v365 = vpop.permute.xlu0 %364
    %366 = vrot.lane.b32.xlu0 %v360, 16
    %v367 = vpop.permute.xlu0 %366
    %368 = vrot.lane.b32.xlu0 %v361, 16
    %v369 = vpop.permute.xlu0 %368
    %v370 = vsel %vm81, %v367, %v369
    %v371 = vsel %vm81, %v365, %v367
    %v372 = vsel %vm81, %v363, %v365
    %v373 = vsel %vm81, %v369, %v363
    %374 = vrot.lane.b32.xlu0 %v358, 112
    %v375 = vpop.permute.xlu0 %374
    %376 = vrot.lane.b32.xlu0 %v359, 112
    %v377 = vpop.permute.xlu0 %376
    %378 = vrot.lane.b32.xlu0 %v360, 112
    %v379 = vpop.permute.xlu0 %378
    %380 = vrot.lane.b32.xlu0 %v361, 112
    %v381 = vpop.permute.xlu0 %380
    %v382 = vsel %vm94, %v379, %v381
    %v383 = vsel %vm94, %v377, %v379
    %v384 = vsel %vm94, %v375, %v377
    %v385 = vsel %vm94, %v381, %v375
    %v386 = vsel %vm57, %v384, %v373
    %v387 = vsel %vm58, %v383, %v372
    %v388 = vsel %vm59, %v382, %v371
    %v389 = vsel %vm60, %v385, %v370
    %v390 = vsel %vm61, %v373, %v384
    %v391 = vsel %vm62, %v372, %v383
    %v392 = vsel %vm63, %v371, %v382
    %v393 = vsel %vm64, %v370, %v385
    %394 = vrot.lane.b32.xlu0 %v386, 1
    %v395 = vpop.permute.xlu0 %394
    %396 = vrot.lane.b32.xlu0 %v387, 1
    %v397 = vpop.permute.xlu0 %396
    %398 = vrot.lane.b32.xlu0 %v388, 1
    %v399 = vpop.permute.xlu0 %398
    %400 = vrot.lane.b32.xlu0 %v389, 1
    %v401 = vpop.permute.xlu0 %400
    %v402 = vsel %vm115, %v399, %v401
    %v403 = vsel %vm115, %v397, %v399
    %v404 = vsel %vm115, %v395, %v397
    %v405 = vsel %vm115, %v401, %v395
    %406 = vrot.lane.b32.xlu0 %v386, 127
    %v407 = vpop.permute.xlu0 %406
    %408 = vrot.lane.b32.xlu0 %v387, 127
    %v409 = vpop.permute.xlu0 %408
    %410 = vrot.lane.b32.xlu0 %v388, 127
    %v411 = vpop.permute.xlu0 %410
    %412 = vrot.lane.b32.xlu0 %v389, 127
    %v413 = vpop.permute.xlu0 %412
    %v414 = vsel %vm128, %v411, %v413
    %v415 = vsel %vm128, %v409, %v411
    %v416 = vsel %vm128, %v407, %v409
    %v417 = vsel %vm128, %v413, %v407
    %v418 = vsel %vm65, %v416, %v405
    %v419 = vsel %vm66, %v415, %v404
    %v420 = vsel %vm67, %v414, %v403
    %v421 = vsel %vm68, %v417, %v402
    %v422 = vsel %vm69, %v405, %v416
    %v423 = vsel %vm70, %v404, %v415
    %v424 = vsel %vm71, %v403, %v414
    %v425 = vsel %vm72, %v402, %v417
    %426 = vrot.lane.b32.xlu0 %v358, 1
    %v427 = vpop.permute.xlu0 %426
    %428 = vrot.lane.b32.xlu0 %v359, 1
    %v429 = vpop.permute.xlu0 %428
    %430 = vrot.lane.b32.xlu0 %v360, 1
    %v431 = vpop.permute.xlu0 %430
    %432 = vrot.lane.b32.xlu0 %v361, 1
    %v433 = vpop.permute.xlu0 %432
    %v434 = vsel %vm115, %v431, %v433
    %v435 = vsel %vm115, %v429, %v431
    %v436 = vsel %vm115, %v427, %v429
    %v437 = vsel %vm115, %v433, %v427
    %438 = vrot.lane.b32.xlu0 %v358, 127
    %v439 = vpop.permute.xlu0 %438
    %440 = vrot.lane.b32.xlu0 %v359, 127
    %v441 = vpop.permute.xlu0 %440
    %442 = vrot.lane.b32.xlu0 %v360, 127
    %v443 = vpop.permute.xlu0 %442
    %444 = vrot.lane.b32.xlu0 %v361, 127
    %v445 = vpop.permute.xlu0 %444
    %v446 = vsel %vm128, %v443, %v445
    %v447 = vsel %vm128, %v441, %v443
    %v448 = vsel %vm128, %v439, %v441
    %v449 = vsel %vm128, %v445, %v439
    %v450 = vsel %vm65, %v448, %v437
    %v451 = vsel %vm66, %v447, %v436
    %v452 = vsel %vm67, %v446, %v435
    %v453 = vsel %vm68, %v449, %v434
    %v454 = vsel %vm69, %v437, %v448
    %v455 = vsel %vm70, %v436, %v447
    %v456 = vsel %vm71, %v435, %v446
    %v457 = vsel %vm72, %v434, %v449
    %458 = vrot.lane.b32.xlu0 %v390, 1
    %v459 = vpop.permute.xlu0 %458
    %460 = vrot.lane.b32.xlu0 %v391, 1
    %v461 = vpop.permute.xlu0 %460
    %462 = vrot.lane.b32.xlu0 %v392, 1
    %v463 = vpop.permute.xlu0 %462
    %464 = vrot.lane.b32.xlu0 %v393, 1
    %v465 = vpop.permute.xlu0 %464
    %v466 = vsel %vm115, %v463, %v465
    %v467 = vsel %vm115, %v461, %v463
    %v468 = vsel %vm115, %v459, %v461
    %v469 = vsel %vm115, %v465, %v459
    %470 = vrot.lane.b32.xlu0 %v390, 127
    %v471 = vpop.permute.xlu0 %470
    %472 = vrot.lane.b32.xlu0 %v391, 127
    %v473 = vpop.permute.xlu0 %472
    %474 = vrot.lane.b32.xlu0 %v392, 127
    %v475 = vpop.permute.xlu0 %474
    %476 = vrot.lane.b32.xlu0 %v393, 127
    %v477 = vpop.permute.xlu0 %476
    %v478 = vsel %vm128, %v475, %v477
    %v479 = vsel %vm128, %v473, %v475
    %v480 = vsel %vm128, %v471, %v473
    %v481 = vsel %vm128, %v477, %v471
    %v482 = vsel %vm65, %v480, %v469
    %v483 = vsel %vm66, %v479, %v468
    %v484 = vsel %vm67, %v478, %v467
    %v485 = vsel %vm68, %v481, %v466
    %v486 = vsel %vm69, %v469, %v480
    %v487 = vsel %vm70, %v468, %v479
    %v488 = vsel %vm71, %v467, %v478
    %v489 = vsel %vm72, %v466, %v481
    %v490 = vld [vmem:[%s3] sm:$0xff]
    %v491 = vld [vmem:[%s4] sm:$0xff]
    %493 = vset.pattern.permute.xlu0 0
    %494 = vperm.xlu0 %493, %v491
    %v495 = vpop.permute.xlu0 %494
    %v498 = vsel %vm212, %v490, 0
    %500 = vmatprep.subr.mxu0 %v419
    %501 = vmatpush1.msra.mxu0 %v418
    %502 = vmatprep.subr.mxu0 %v387
    %503 = vmatpush1.msra.mxu0 %v386
    %504 = vmatprep.subr.mxu0 %v423
    %505 = vmatpush1.msra.mxu0 %v422
    %506 = vmatprep.subr.mxu0 %v451
    %507 = vmatpush1.msra.mxu0 %v450
    %508 = vmatprep.subr.mxu0 %v359
    %509 = vmatpush1.msra.mxu0 %v358
    %510 = vmatprep.subr.mxu0 %v455
    %511 = vmatpush1.msra.mxu0 %v454
    %512 = vmatprep.subr.mxu0 %v483
    %513 = vmatpush1.msra.mxu0 %v482
    %514 = vmatprep.subr.mxu0 %v391
    %515 = vmatpush1.msra.mxu0 %v390
    %516 = vmatprep.subr.mxu0 %v487
    %517 = vmatpush1.msra.mxu0 %v486
    %518 = vmatprep.subr.mxu0 0.0
    %519 = vmatpush1.msra.mxu0 0.0
    %520 = vmatprep.subr.mxu0 0.0
    %521 = vmatpush1.msra.mxu0 0.0
    %522 = vmatprep.subr.mxu0 0.0
    %523 = vmatpush1.msra.mxu0 0.0
    %524 = vmatprep.subr.mxu0 0.0
    %525 = vmatpush1.msra.mxu0 0.0
    %526 = vmatprep.subr.mxu0 0.0
    %527 = vmatpush1.msra.mxu0 0.0
    %528 = vmatprep.subr.mxu0 0.0
    %529 = vmatpush1.msra.mxu0 0.0
    %530 = vmatprep.subr.mxu0 0.0
    %531 = vmatpush1.msra.mxu0 0.0
    %532 = vmatprep.subr.mxu0 0.0
    %533 = vmatpush1.msra.mxu0 0.0
    %534 = vmatprep.subr.mxu0 0.0
    %535 = vmatpush1.msra.mxu0 0.0
    %536 = vmatprep.subr.mxu0 0.0
    %537 = vmatpush1.msra.mxu0 0.0
    %538 = vmatprep.subr.mxu0 0.0
    %539 = vmatpush1.msra.mxu0 0.0
    %540 = vmatprep.subr.mxu0 0.0
    %541 = vmatpush1.msra.mxu0 0.0
    %542 = vmatprep.subr.mxu0 0.0
    %543 = vmatpush1.msra.mxu0 0.0
    %544 = vmatprep.subr.mxu0 0.0
    %545 = vmatpush1.msra.mxu0 0.0
    %546 = vmatprep.subr.mxu0 0.0
    %547 = vmatpush1.msra.mxu0 0.0
    %548 = vmatprep.subr.mxu0 0.0
    %549 = vmatpush1.msra.mxu0 0.0
    %550 = vmatprep.subr.mxu0 0.0
    %551 = vmatpush1.msra.mxu0 0.0
    %552 = vmatprep.subr.mxu0 0.0
    %553 = vmatpush1.msra.mxu0 0.0
    %554 = vmatprep.subr.mxu0 0.0
    %555 = vmatpush1.msra.mxu0 0.0
    %556 = vmatprep.subr.mxu0 0.0
    %557 = vmatpush1.msra.mxu0 0.0
    %558 = vmatprep.subr.mxu0 0.0
    %559 = vmatpush1.msra.mxu0 0.0
    %560 = vmatprep.subr.mxu0 0.0
    %561 = vmatpush1.msra.mxu0 0.0
    %562 = vmatprep.subr.mxu0 0.0
    %563 = vmatpush1.msra.mxu0 0.0
    %564 = vmatprep.mubr.f32.mxu0 0.0
    %565 = vmatmul.mubr.f32.gmra.mrb[0].mxu0 %v498
    %v566 = vpop.f32.mrb[0].mxu0
    %v567 = vadd.f32 %v495, %v566
    %v568 = vpop.f32.mrb[0].mxu0
    %v569 = vadd.f32 %v495, %v568
    %570 = vdwg.mxu0
    %571 = vmatprep.subr.mxu0 %v421
    %572 = vmatpush1.msra.mxu0 %v420
    %573 = vmatprep.subr.mxu0 %v389
    %574 = vmatpush1.msra.mxu0 %v388
    %575 = vmatprep.subr.mxu0 %v425
    %576 = vmatpush1.msra.mxu0 %v424
    %577 = vmatprep.subr.mxu0 %v453
    %578 = vmatpush1.msra.mxu0 %v452
    %579 = vmatprep.subr.mxu0 %v361
    %580 = vmatpush1.msra.mxu0 %v360
    %581 = vmatprep.subr.mxu0 %v457
    %582 = vmatpush1.msra.mxu0 %v456
    %583 = vmatprep.subr.mxu0 %v485
    %584 = vmatpush1.msra.mxu0 %v484
    %585 = vmatprep.subr.mxu0 %v393
    %586 = vmatpush1.msra.mxu0 %v392
    %587 = vmatprep.subr.mxu0 %v489
    %588 = vmatpush1.msra.mxu0 %v488
    %589 = vmatprep.subr.mxu0 0.0
    %590 = vmatpush1.msra.mxu0 0.0
    %591 = vmatprep.subr.mxu0 0.0
    %592 = vmatpush1.msra.mxu0 0.0
    %593 = vmatprep.subr.mxu0 0.0
    %594 = vmatpush1.msra.mxu0 0.0
    %595 = vmatprep.subr.mxu0 0.0
    %596 = vmatpush1.msra.mxu0 0.0
    %597 = vmatprep.subr.mxu0 0.0
    %598 = vmatpush1.msra.mxu0 0.0
    %599 = vmatprep.subr.mxu0 0.0
    %600 = vmatpush1.msra.mxu0 0.0
    %601 = vmatprep.subr.mxu0 0.0
    %602 = vmatpush1.msra.mxu0 0.0
    %603 = vmatprep.subr.mxu0 0.0
    %604 = vmatpush1.msra.mxu0 0.0
    %605 = vmatprep.subr.mxu0 0.0
    %606 = vmatpush1.msra.mxu0 0.0
    %607 = vmatprep.subr.mxu0 0.0
    %608 = vmatpush1.msra.mxu0 0.0
    %609 = vmatprep.subr.mxu0 0.0
    %610 = vmatpush1.msra.mxu0 0.0
    %611 = vmatprep.subr.mxu0 0.0
    %612 = vmatpush1.msra.mxu0 0.0
    %613 = vmatprep.subr.mxu0 0.0
    %614 = vmatpush1.msra.mxu0 0.0
    %615 = vmatprep.subr.mxu0 0.0
    %616 = vmatpush1.msra.mxu0 0.0
    %617 = vmatprep.subr.mxu0 0.0
    %618 = vmatpush1.msra.mxu0 0.0
    %619 = vmatprep.subr.mxu0 0.0
    %620 = vmatpush1.msra.mxu0 0.0
    %621 = vmatprep.subr.mxu0 0.0
    %622 = vmatpush1.msra.mxu0 0.0
    %623 = vmatprep.subr.mxu0 0.0
    %624 = vmatpush1.msra.mxu0 0.0
    %625 = vmatprep.subr.mxu0 0.0
    %626 = vmatpush1.msra.mxu0 0.0
    %627 = vmatprep.subr.mxu0 0.0
    %628 = vmatpush1.msra.mxu0 0.0
    %629 = vmatprep.subr.mxu0 0.0
    %630 = vmatpush1.msra.mxu0 0.0
    %631 = vmatprep.subr.mxu0 0.0
    %632 = vmatpush1.msra.mxu0 0.0
    %633 = vmatprep.subr.mxu0 0.0
    %634 = vmatpush1.msra.mxu0 0.0
    %635 = vmatprep.mubr.f32.mxu0 0.0
    %636 = vmatmul.mubr.f32.gmra.mrb[0].mxu0 %v498
    %v637 = vpop.f32.mrb[0].mxu0
    %v638 = vadd.f32 %v495, %v637
    %v639 = vpop.f32.mrb[0].mxu0
    %v640 = vadd.f32 %v495, %v639
    %641 = vdwg.mxu0
    %v642 = vmax.f32 %v567, 0.0
    %v643 = vmax.f32 %v569, 0.0
    %v644 = vmax.f32 %v638, 0.0
    %v645 = vmax.f32 %v640, 0.0
    %v646 = vadd.f32 %v35, %v642
    %v647 = vadd.f32 %v36, %v643
    %v648 = vadd.f32 %v38, %v644
    %v649 = vadd.f32 %v39, %v645
    %650 = vst [vmem:[#allocation5] sm:$0xff] %v646
    %651 = vst [vmem:[#allocation5 + $0x8] sm:$0xff] %v647
    %s652 = scalar_lea.vmem [#allocation5], 16
    %653 = vst [vmem:[%s652] sm:$0xff] %v648
    %654 = vst [vmem:[%s652 + $0x8] sm:$0xff] %v649
    // Predicated region
    $region26: #{tpu_custom_call.1} parent=1 // pred_check
      _
    $region27: #{tpu_custom_call.1} parent=1 // pred_check_branch
      %656 = sbr.rel (0) target = $region29
    $region28: #{tpu_custom_call.1} parent=1 // pred_region
      %s658 = ssub.s32 512, 512
      %659 = vsyncadd [#allocation4], %s658
      %s660 = sshll.u32 [#allocation5], 4
      %s661 = int_to_ptr.vmem [resolvable:$true] %s660
      %666 = dma.vmem_to_hbm [thread:$0]  %s661, 512, %s5, [#allocation4], 256, 256, 16
    $region29: #{tpu_custom_call.1} parent=1 // pred_fallthru
      _
    // Predicated region
    $region30: #{tpu_custom_call.1} parent=1 // pred_check
      _
    $region31: #{tpu_custom_call.1} parent=1 // pred_check_branch
      %668 = sbr.rel (0) target = $region33
    $region32: #{tpu_custom_call.1} parent=1 // pred_region
      %669 = dma.done [#allocation4], 512
    $region33: #{tpu_custom_call.1} parent=1 // pred_fallthru
      _
    %670 = vsyncpa [#allocation3], 1
    %671 = vsyncpa [#allocation4], 1

</llo_original>
